<compile_context>
chip_gen: v7x
topology: tpu7x:2x2x1
jax: 0.10.0
libtpu: 0.0.40
codegen_flags: <defaults>
</compile_context>

<pallas_src>
import functools

import jax
import jax.numpy as jnp
from jax.experimental import pallas as pl
from jax.experimental.pallas import tpu as pltpu


def _round_up(x, m):
    return (x + m - 1) // m * m


# ----------------------------------------------------------------------------- #
# Stem kernel: grid = (B, NS).  Per step: 3x3 "same" conv as im2col matmul
# (bf16 MXU, f32 acc) + ReLU + pooled-sum accumulation into the resident output
# block (8 sublane-partial sums; the sublane collapse is deferred to the head).
# ----------------------------------------------------------------------------- #
def stem_kernel(patches_ref, wconv_ref, bconv_ref, pooled_ref):
    s = pl.program_id(1)

    @pl.when(s == 0)
    def _():
        pooled_ref[...] = jnp.zeros_like(pooled_ref)

    conv = jnp.dot(patches_ref[...], wconv_ref[...],
                   preferred_element_type=jnp.float32)
    conv = jnp.maximum(conv + bconv_ref[...], 0.0)                    # (tile_s, Cp)
    ts, cp = conv.shape
    # pure VPU adds under the MXU/DMA; no per-step XLU sublane reduce
    pooled_ref[...] += conv.reshape(ts // 8, 8, cp).sum(axis=0)       # (8, Cp)


# ----------------------------------------------------------------------------- #
# Head kernel (single grid step, batched over B): pool finalize, backbone.fc,
# ReLU, AttentionBlock (g/theta/phi, softmax, W, residual), fused pose heads.
# ----------------------------------------------------------------------------- #
def head_kernel(pooled_ref, wfc_ref, bfc_ref, wg_ref, bg_ref, wth_ref, bth_ref,
                wph_ref, bph_ref, ww_ref, bw_ref, whead_ref, bhead_ref, out_ref,
                *, inv_hw):
    f32 = jnp.float32
    bf16 = jnp.bfloat16
    batch = out_ref.shape[0]
    cp = pooled_ref.shape[1]

    # finish AdaptiveAvgPool2d(1): collapse the 8 sublane partial sums, divide by H*W
    pooled = pooled_ref[...].reshape(batch, 8, cp).sum(axis=1) * inv_hw        # (B, Cp)

    # backbone.fc : Linear(Cconv, feat_dim); then outer F.relu
    feat = jnp.dot(pooled.astype(bf16), wfc_ref[...],
                   preferred_element_type=f32) + bfc_ref[...]
    feat = jnp.maximum(feat, 0.0)                                              # (B, Dp)
    featb = feat.astype(bf16)

    # AttentionBlock: g / theta / phi projections
    g = jnp.dot(featb, wg_ref[...], preferred_element_type=f32) + bg_ref[...]    # (B, D8)
    th = jnp.dot(featb, wth_ref[...], preferred_element_type=f32) + bth_ref[...]  # (B, D8)
    ph = jnp.dot(featb, wph_ref[...], preferred_element_type=f32) + bph_ref[...]  # (B, D8)

    # f[b,i,j] = phi[b,i] * theta[b,j]  (== phi_x @ theta_x^T); softmax over j; y = f_div_C @ g
    f = ph[:, :, None] * th[:, None, :]                                        # (B, D8, D8)
    f = f - jnp.max(f, axis=-1, keepdims=True)
    e = jnp.exp(f)
    sm = e * pl.reciprocal(jnp.sum(e, axis=-1, keepdims=True), approx=True)
    y = jnp.sum(sm * g[:, None, :], axis=-1)                                   # (B, D8)
    # TODO(synk): at production feat_dim=2048 (D8=256) row-block the softmax and do the
    #             weighted sum on the MXU to bound live vregs (64-vreg file).

    wy = jnp.dot(y.astype(bf16), ww_ref[...], preferred_element_type=f32) + bw_ref[...]
    z = wy + feat                                                              # residual

    # dropout: eval-mode identity. Pose heads fused: [fc_xyz | fc_wpqr | 0-pad]
    out_ref[...] = jnp.dot(z.astype(bf16), whead_ref[...],
                           preferred_element_type=f32) + bhead_ref[...]        # (B, OUTP)


# ----------------------------------------------------------------------------- #
# Parameter init (deterministic, kaiming_normal_ like PyTorch, zero biases).
# ----------------------------------------------------------------------------- #
def _kaiming_normal(key, shape, fan_in):
    std = (2.0 / float(fan_in)) ** 0.5
    return jax.random.normal(key, shape, dtype=jnp.float32) * std


def init_params(key, cin=4, c_conv=64, feat_dim=256):
    d8 = feat_dim // 8
    ks = jax.random.split(key, 8)
    params = {
        # conv stem weight stored as (9*Cin, Cconv); kaiming fan_in = Cin*3*3
        "wconv": _kaiming_normal(ks[0], (9 * cin, c_conv), fan_in=9 * cin),
        "bconv": jnp.zeros((1, c_conv), jnp.float32),
        # backbone.fc : Linear(c_conv, feat_dim) stored as (in, out)
        "wfc": _kaiming_normal(ks[1], (c_conv, feat_dim), fan_in=c_conv),
        "bfc": jnp.zeros((1, feat_dim), jnp.float32),
        # AttentionBlock: g / theta / phi : Linear(feat_dim, feat_dim // 8)
        "wg": _kaiming_normal(ks[2], (feat_dim, d8), fan_in=feat_dim),
        "bg": jnp.zeros((1, d8), jnp.float32),
        "wth": _kaiming_normal(ks[3], (feat_dim, d8), fan_in=feat_dim),
        "bth": jnp.zeros((1, d8), jnp.float32),
        "wph": _kaiming_normal(ks[4], (feat_dim, d8), fan_in=feat_dim),
        "bph": jnp.zeros((1, d8), jnp.float32),
        # AttentionBlock.W : Linear(feat_dim // 8, feat_dim)
        "ww": _kaiming_normal(ks[5], (d8, feat_dim), fan_in=d8),
        "bw": jnp.zeros((1, feat_dim), jnp.float32),
    }
    # fc_xyz : Linear(feat_dim, 3), fc_wpqr : Linear(feat_dim, 3); fused as (feat_dim, 6)
    w_xyz = _kaiming_normal(ks[6], (feat_dim, 3), fan_in=feat_dim)
    w_wpqr = _kaiming_normal(ks[7], (feat_dim, 3), fan_in=feat_dim)
    params["whead"] = jnp.concatenate([w_xyz, w_wpqr], axis=1)   # cat((xyz, wpqr), dim=1)
    params["bhead"] = jnp.zeros((1, 6), jnp.float32)
    return params


# ----------------------------------------------------------------------------- #
# Wrapper: layout glue (NHWC, im2col, lane-dense zero padding) + two pallas_calls.
# ----------------------------------------------------------------------------- #
def atloc_forward(x_nchw, params, *, tile_s=None):
    B, C, H, W = x_nchw.shape
    HW = H * W
    cin9 = 9 * C
    c_conv = params["wconv"].shape[1]
    feat_dim = params["wfc"].shape[1]

    cp = _round_up(c_conv, 128)      # conv output channels, lane-dense
    dp = _round_up(feat_dim, 128)    # feature dim, lane-dense
    out_pad = 128                    # pose-head output columns, lane-dense

    # ---- VMEM budget: ~75% of physical per generation, capped at 96 MiB ----
    try:
        vmem_cap = getattr(pltpu.get_tpu_info(), "vmem_capacity_bytes", 64 * 1024 * 1024)
    except Exception:
        vmem_cap = 64 * 1024 * 1024
    vmem_limit = int(min(96 * 1024 * 1024, vmem_cap * 3 // 4))

    # ---- glue: NCHW -> NHWC, "same" pad, 3x3 im2col; contraction dim stays 36 ----
    # TODO(synk): build the 9 taps in-kernel from a halo image tile to cut the 9x
    #             HBM read amplification of the stem at production image sizes.
    x = jnp.transpose(x_nchw, (0, 2, 3, 1)).astype(jnp.float32)
    xpad = jnp.pad(x, ((0, 0), (1, 1), (1, 1), (0, 0)))
    taps = [xpad[:, dy:dy + H, dx:dx + W, :] for dy in range(3) for dx in range(3)]
    patches = jnp.concatenate(taps, axis=-1).reshape(B * HW, cin9).astype(jnp.bfloat16)

    # conv stem weights: lane-dense output channels, bf16 MXU feed, K un-padded
    wconv = jnp.pad(params["wconv"], ((0, 0), (0, cp - c_conv))).astype(jnp.bfloat16)
    bconv = jnp.pad(params["bconv"], ((0, 0), (0, cp - c_conv)))

    # ---- spatial tiling: prefer large tiles to amortize per-step overhead ----
    if tile_s is None:
        tile_s = HW
        for t in (8192, 4096, 2048, 1024, 512, 256, 128, 64, 32, 16):
            if HW % t == 0:
                tile_s = t
                break
    assert HW % tile_s == 0 and tile_s % 16 == 0, \
        "tile_s must divide H*W and be a multiple of 16"
    ns = HW // tile_s

    stem_flops = 2 * B * HW * cin9 * c_conv
    stem_bytes = patches.size * 2 + wconv.size * 2 + bconv.size * 4 + B * 8 * cp * 4

    # ---- stem call: conv + ReLU + pooled partial-sums (accumulator = output block) ----
    pooled_partial = pl.pallas_call(
        stem_kernel,
        out_shape=jax.ShapeDtypeStruct((B * 8, cp), jnp.float32),
        grid_spec=pltpu.PrefetchScalarGridSpec(
            num_scalar_prefetch=0,
            grid=(B, ns),
            in_specs=[
                pl.BlockSpec((tile_s, cin9), lambda b, s: (b * ns + s, 0)),
                pl.BlockSpec((cin9, cp), lambda b, s: (0, 0)),
                pl.BlockSpec((1, cp), lambda b, s: (0, 0)),
            ],
            out_specs=pl.BlockSpec((8, cp), lambda b, s: (b, 0)),
        ),
        compiler_params=pltpu.CompilerParams(
            dimension_semantics=("parallel", "arbitrary"),
            vmem_limit_bytes=vmem_limit,
        ),
        cost_estimate=pl.CostEstimate(flops=stem_flops, transcendentals=0,
                                      bytes_accessed=stem_bytes),
    )(patches, wconv, bconv)
    # TODO(synk): for v7x with B==1, split the spatial axis into 2 parallel halves
    #             (two partial-pool outputs) so both TensorCores stay busy.

    # ---- head weights: bf16 MXU feeds (f32 accumulation), lane-dense zero padding ----
    wfc = jnp.pad(params["wfc"], ((0, cp - c_conv), (0, dp - feat_dim))).astype(jnp.bfloat16)
    bfc = jnp.pad(params["bfc"], ((0, 0), (0, dp - feat_dim)))
    wg = jnp.pad(params["wg"], ((0, dp - feat_dim), (0, 0))).astype(jnp.bfloat16)
    wth = jnp.pad(params["wth"], ((0, dp - feat_dim), (0, 0))).astype(jnp.bfloat16)
    wph = jnp.pad(params["wph"], ((0, dp - feat_dim), (0, 0))).astype(jnp.bfloat16)
    bg, bth, bph = params["bg"], params["bth"], params["bph"]
    ww = jnp.pad(params["ww"], ((0, 0), (0, dp - feat_dim))).astype(jnp.bfloat16)
    bw = jnp.pad(params["bw"], ((0, 0), (0, dp - feat_dim)))
    whead = jnp.pad(params["whead"], ((0, dp - feat_dim), (0, out_pad - 6))).astype(jnp.bfloat16)
    bhead = jnp.pad(params["bhead"], ((0, 0), (0, out_pad - 6)))

    head_in = (pooled_partial, wfc, bfc, wg, bg, wth, bth, wph, bph, ww, bw, whead, bhead)
    head_specs = [pl.BlockSpec(a.shape, lambda i: (0, 0)) for a in head_in]

    # ---- head call: pool finalize + fc + attention + pose heads, batched over B ----
    out = pl.pallas_call(
        functools.partial(head_kernel, inv_hw=1.0 / float(HW)),
        out_shape=jax.ShapeDtypeStruct((B, out_pad), jnp.float32),
        grid_spec=pltpu.PrefetchScalarGridSpec(
            num_scalar_prefetch=0,
            grid=(1,),
            in_specs=head_specs,
            out_specs=pl.BlockSpec((B, out_pad), lambda i: (0, 0)),
        ),
        compiler_params=pltpu.CompilerParams(
            dimension_semantics=("arbitrary",),
            vmem_limit_bytes=vmem_limit,
        ),
    )(*head_in)

    # first 6 columns = cat((xyz, wpqr), 1)
    return out[:, :6]


if __name__ == "__main__":
    key = jax.random.PRNGKey(0)
    kx, kp_ = jax.random.split(key)

    B, C, H, W = 2, 4, 16, 16          # small synthetic shapes
    FEAT_DIM = 256                     # scaled-down feat_dim (module default 2048)
    C_CONV = 64                        # scaled-down fe_out_planes

    x = jax.random.normal(kx, (B, C, H, W), dtype=jnp.float32)
    params = init_params(kp_, cin=C, c_conv=C_CONV, feat_dim=FEAT_DIM)

    # smoke test: force 2 spatial tiles so the resident pooled-sum accumulator path
    # (init at s==0, accumulate, writeback on batch change) is exercised.
    out = atloc_forward(x, params, tile_s=128)
    out = jax.block_until_ready(out)
    assert out.shape == (B, 6) and out.dtype == jnp.float32
    print("KERNEL_OK")
</pallas_src>

<mosaic_0001>
module attributes {stable_mosaic.version = 11 : i64} {
  func.func @stem_kernel(%arg0: i32, %arg1: i32, %arg2: memref<128x36xbf16, #tpu.memory_space<vmem>>, %arg3: memref<36x128xbf16, #tpu.memory_space<vmem>>, %arg4: memref<1x128xf32, #tpu.memory_space<vmem>>, %arg5: memref<8x128xf32, #tpu.memory_space<vmem>>) attributes {dimension_semantics = [#tpu.dimension_semantics<parallel>, #tpu.dimension_semantics<arbitrary>], iteration_bounds = array<i64: 2, 2>, scalar_prefetch = 0 : i64, scratch_operands = 0 : i64, tpu.core_type = #tpu.core_type<tc>, window_params = [{transform_indices = @transform_0, window_bounds = array<i64: 128, 36>}, {pipeline_mode = #tpu.pipeline_mode<synchronous>, transform_indices = @transform_1, window_bounds = array<i64: 36, 128>}, {pipeline_mode = #tpu.pipeline_mode<synchronous>, transform_indices = @transform_2, window_bounds = array<i64: 1, 128>}, {transform_indices = @transform_3, window_bounds = array<i64: 8, 128>}]} {
    %c0_i32 = arith.constant 0 : i32
    %0 = arith.cmpi eq, %arg1, %c0_i32 : i32
    %1 = arith.extui %0 : i1 to i32
    %c0_i32_0 = arith.constant 0 : i32
    %2 = arith.cmpi ne, %1, %c0_i32_0 : i32
    scf.if %2 {
      %cst_12 = arith.constant 0.000000e+00 : f32
      %16 = vector.broadcast %cst_12 : f32 to vector<8x128xf32>
      %c0_13 = arith.constant 0 : index
      %c0_14 = arith.constant 0 : index
      %17 = vector.load %arg5[%c0_13, %c0_14] : memref<8x128xf32, #tpu.memory_space<vmem>>, vector<8x128xf32>
      tpu.vector_store %arg5[%c0_13, %c0_14], %16 {strides = array<i32>} : memref<8x128xf32, #tpu.memory_space<vmem>>, vector<8x128xf32>,
    } else {
    }
    %c0 = arith.constant 0 : index
    %c0_1 = arith.constant 0 : index
    %3 = vector.load %arg2[%c0, %c0_1] : memref<128x36xbf16, #tpu.memory_space<vmem>>, vector<128x36xbf16>
    %c0_2 = arith.constant 0 : index
    %c0_3 = arith.constant 0 : index
    %4 = vector.load %arg3[%c0_2, %c0_3] : memref<36x128xbf16, #tpu.memory_space<vmem>>, vector<36x128xbf16>
    %cst = arith.constant dense<0.000000e+00> : vector<128x128xf32>
    %5 = tpu.matmul %3, %4, %cst {dimension_numbers = #tpu.dot_dimension_numbers<[1], [0], [0], [1], [0, 0, 1, 1], [], []>} : vector<128x36xbf16>, vector<36x128xbf16>, vector<128x128xf32> -> vector<128x128xf32>
    %c0_4 = arith.constant 0 : index
    %c0_5 = arith.constant 0 : index
    %6 = vector.load %arg4[%c0_4, %c0_5] : memref<1x128xf32, #tpu.memory_space<vmem>>, vector<1x128xf32>
    %7 = vector.broadcast %6 : vector<1x128xf32> to vector<128x128xf32>
    %8 = arith.addf %5, %7 : vector<128x128xf32>
    %cst_6 = arith.constant 0.000000e+00 : f32
    %9 = vector.broadcast %cst_6 : f32 to vector<128x128xf32>
    %10 = arith.maximumf %8, %9 : vector<128x128xf32>
    %c0_7 = arith.constant 0 : index
    %c0_8 = arith.constant 0 : index
    %11 = vector.load %arg5[%c0_7, %c0_8] : memref<8x128xf32, #tpu.memory_space<vmem>>, vector<8x128xf32>
    %12 = vector.shape_cast %10 : vector<128x128xf32> to vector<16x8x128xf32>
    %cst_9 = arith.constant dense<0.000000e+00> : vector<8x128xf32>
    %13 = vector.multi_reduction <add>, %12, %cst_9 [0] : vector<16x8x128xf32> to vector<8x128xf32>
    %14 = arith.addf %11, %13 : vector<8x128xf32>
    %c0_10 = arith.constant 0 : index
    %c0_11 = arith.constant 0 : index
    %15 = vector.load %arg5[%c0_10, %c0_11] : memref<8x128xf32, #tpu.memory_space<vmem>>, vector<8x128xf32>
    tpu.vector_store %arg5[%c0_10, %c0_11], %14 {strides = array<i32>} : memref<8x128xf32, #tpu.memory_space<vmem>>, vector<8x128xf32>,
    return
  }
  func.func @transform_0(%arg0: i32, %arg1: i32) -> (i32, i32) {
    %c2_i32 = arith.constant 2 : i32
    %0 = arith.muli %arg0, %c2_i32 : i32
    %1 = arith.addi %0, %arg1 : i32
    %c0_i32 = arith.constant 0 : i32
    %c0_i32_0 = arith.constant 0 : i32
    return %1, %c0_i32 : i32, i32
  }
  func.func @transform_1(%arg0: i32, %arg1: i32) -> (i32, i32) {
    %c0_i32 = arith.constant 0 : i32
    %c0_i32_0 = arith.constant 0 : i32
    %c0_i32_1 = arith.constant 0 : i32
    return %c0_i32, %c0_i32_0 : i32, i32
  }
  func.func @transform_2(%arg0: i32, %arg1: i32) -> (i32, i32) {
    %c0_i32 = arith.constant 0 : i32
    %c0_i32_0 = arith.constant 0 : i32
    %c0_i32_1 = arith.constant 0 : i32
    return %c0_i32, %c0_i32_0 : i32, i32
  }
  func.func @transform_3(%arg0: i32, %arg1: i32) -> (i32, i32) {
    %c0_i32 = arith.constant 0 : i32
    %c0_i32_0 = arith.constant 0 : i32
    return %arg0, %c0_i32 : i32, i32
  }
}

</mosaic_0001>

<llo_original>
// kernel: tpu_custom_call.1
$region0: #{tpu_custom_call.1}
  #allocation0 [shape = 'u32[]', space=smem, size = 0x4, offset = 0x4, fixed_abs, tag = 'smem constant byte address 0x4 - core index']
  #allocation1 [shape = 'u32[144,128]{1,0:T(1,128)}', space=vmem, size = 0x12000, scoped, tag = 'internal scratch']
  %s0 = inlined_call_operand.vmem [shape: bf16[512,36], index: 0, kind: input, shape index: {}]
  %s1 = inlined_call_operand.vmem [shape: bf16[36,128], index: 1, kind: input, shape index: {}]
  %s2 = inlined_call_operand.vmem [shape: f32[1,128], index: 2, kind: input, shape index: {}]
  %s3 = inlined_call_operand.hbm [shape: f32[16,128], index: 3, kind: output, shape index: {}]
  %s4 = sld [smem:[#allocation0]]
  $region49: #{tpu_custom_call.1} parent=0
    _
  %s6 = ssub.s32 1, %s4
  %s7 = scalar_select 0, %s6, %s4
  $region1: #{tpu_custom_call.1} parent=0
    #allocation2 [shape = 'u8[8192]{0}', space=vmem, size = 0x2000, scoped, tag = 'output window, operand 0']
    #allocation3 [shape = 's32[2]{0}', space=sflag, size = 0x8, scoped, tag = 'scoped memory for tpu_custom_call.1']
    %8 = vsyncpa [#allocation3], 0
    %s9 = scalar_lea.sflag [#allocation3], 1
    %10 = vsyncpa %s9, 0
    loop: start=0, step=1, limit=6
    $region2: #{tpu_custom_call.1} parent=1 // loop_pre_header
      _
    $region3: #{tpu_custom_call.1} parent=1 // loop_header
      %s12 = sphi 0, %s16
      %p13 = scmp.ge.s32.totalorder %s12, 6
      %s19 = sphi 0, %s31
      %s20 = sphi 0, %s27
      %s21 = sphi 0, %s19
      %s22 = sphi 0, %s20
      %s23 = sphi 0, %s21
      %s24 = sphi 0, %s22
      %s38 = sphi 0, %s40
      %s41 = sphi 0, %s38
      %s42 = sphi 0, %s41
      %s58 = sphi 0, %s42
      %s62 = sphi 0, %s62
      %s64 = sphi 0, %s62
      %s65 = sphi 0, %s64
      %s79 = sphi 0, %s65
      %s83 = sphi 0, %s83
      %s85 = sphi 0, %s83
      %s86 = sphi 0, %s85
      %s100 = sphi 0, %s86
      %s106 = sphi 0, %s108
      %s109 = sphi 0, %s106
      %s110 = sphi 0, %s109
      %s126 = sphi 0, %s110
    $region4: #{tpu_custom_call.1} parent=1 // loop_header_branch
      %15 = sbr.rel (%p13) target = $region8
    $region5: #{tpu_custom_call.1} parent=1 // loop_body
      %s17 = ssub.s32 %s12, 1
      %s18 = ssub.s32 %s12, 2
      %s25 = sadd.s32 1, %s20
      %p26 = scmp.ge.s32.totalorder %s25, 2
      %s27 = scalar_select %p26, 0, %s25
      %s28 = sadd.s32 1, %s19
      %s29 = scalar_select %p26, %s28, %s19
      %p30 = scmp.ge.s32.totalorder %s29, 2
      %s31 = scalar_select %p30, 0, %s29
      %s32 = smul.u32 %s19, 2
      %s33 = sadd.s32 %s32, %s20
      %s34 = smul.u32 %s31, 2
      %s35 = sadd.s32 %s34, %s27
      %s36 = ssub.s32 %s33, %s35
      %p37 = scmp.eq.s32.totalorder %s36, 0
      %s39 = sadd.s32 %s38, 1
      %s40 = scalar_select %p37, %s38, %s39
      %p43 = pneg %p37
      %p44 = scmp.eq.s32.totalorder %s12, 3
      %p45 = por %p43, %p44
      %p46 = scmp.ne.s32.totalorder %s38, %s41
      %p47 = scmp.eq.s32.totalorder %s12, 0
      %p48 = por %p46, %p47
      %p49 = scmp.ne.s32.totalorder %s38, %s41
      %p50 = scmp.eq.s32.totalorder %s17, 3
      %p51 = por %p49, %p50
      %p52 = scmp.ne.s32.totalorder %s41, %s42
      %p53 = scmp.eq.s32.totalorder %s17, 0
      %p54 = por %p52, %p53
      %p55 = scmp.ne.s32.totalorder %s41, %s42
      %p56 = scmp.eq.s32.totalorder %s18, 3
      %p57 = por %p55, %p56
      %p59 = scmp.ne.s32.totalorder %s42, %s58
      %p60 = scmp.eq.s32.totalorder %s18, 0
      %p61 = por %p59, %p60
      %s63 = sadd.s32 %s62, 1
      %p66 = scmp.eq.s32.totalorder %s12, 3
      %p67 = scmp.ne.s32.totalorder %s62, %s64
      %p68 = scmp.eq.s32.totalorder %s12, 0
      %p69 = por %p67, %p68
      %p70 = scmp.ne.s32.totalorder %s62, %s64
      %p71 = scmp.eq.s32.totalorder %s17, 3
      %p72 = por %p70, %p71
      %p73 = scmp.ne.s32.totalorder %s64, %s65
      %p74 = scmp.eq.s32.totalorder %s17, 0
      %p75 = por %p73, %p74
      %p76 = scmp.ne.s32.totalorder %s64, %s65
      %p77 = scmp.eq.s32.totalorder %s18, 3
      %p78 = por %p76, %p77
      %p80 = scmp.ne.s32.totalorder %s65, %s79
      %p81 = scmp.eq.s32.totalorder %s18, 0
      %p82 = por %p80, %p81
      %s84 = sadd.s32 %s83, 1
      %p87 = scmp.eq.s32.totalorder %s12, 3
      %p88 = scmp.ne.s32.totalorder %s83, %s85
      %p89 = scmp.eq.s32.totalorder %s12, 0
      %p90 = por %p88, %p89
      %p91 = scmp.ne.s32.totalorder %s83, %s85
      %p92 = scmp.eq.s32.totalorder %s17, 3
      %p93 = por %p91, %p92
      %p94 = scmp.ne.s32.totalorder %s85, %s86
      %p95 = scmp.eq.s32.totalorder %s17, 0
      %p96 = por %p94, %p95
      %p97 = scmp.ne.s32.totalorder %s85, %s86
      %p98 = scmp.eq.s32.totalorder %s18, 3
      %p99 = por %p97, %p98
      %p101 = scmp.ne.s32.totalorder %s86, %s100
      %p102 = scmp.eq.s32.totalorder %s18, 0
      %p103 = por %p101, %p102
      %s104 = ssub.s32 %s19, %s31
      %p105 = scmp.eq.s32.totalorder %s104, 0
      %s107 = sadd.s32 %s106, 1
      %s108 = scalar_select %p105, %s106, %s107
      %p111 = pneg %p105
      %p112 = scmp.eq.s32.totalorder %s12, 3
      %p113 = por %p111, %p112
      %p114 = scmp.ne.s32.totalorder %s106, %s109
      %p115 = scmp.eq.s32.totalorder %s12, 0
      %p116 = por %p114, %p115
      %p117 = scmp.ne.s32.totalorder %s106, %s109
      %p118 = scmp.eq.s32.totalorder %s17, 3
      %p119 = por %p117, %p118
      %p120 = scmp.ne.s32.totalorder %s109, %s110
      %p121 = scmp.eq.s32.totalorder %s17, 0
      %p122 = por %p120, %p121
      %p123 = scmp.ne.s32.totalorder %s109, %s110
      %p124 = scmp.eq.s32.totalorder %s18, 3
      %p125 = por %p123, %p124
      %p127 = scmp.ne.s32.totalorder %s110, %s126
      %p128 = scmp.eq.s32.totalorder %s18, 0
      %p129 = por %p127, %p128
      %p130 = scmp.le.s32.totalorder 1, %s12
      %p131 = scmp.lt.s32.totalorder %s12, 5
      %p132 = pnand %p130, %p131
      %p133 = pneg %p132
      // Predicated region
      $region9: #{tpu_custom_call.1} parent=5 // pred_check
        _
      $region10: #{tpu_custom_call.1} parent=5 // pred_check_branch
        %135 = sbr.rel (%p132) target = $region12
      $region11: #{tpu_custom_call.1} parent=5 // pred_region
        %s136 = ssub.s32 %s12, 1
        // Predicated region
        $region13: #{tpu_custom_call.1} parent=11 // pred_check
          %p137 = pneg %p75
        $region14: #{tpu_custom_call.1} parent=11 // pred_check_branch
          %139 = sbr.rel (%p137) target = $region16
        $region15: #{tpu_custom_call.1} parent=11 // pred_region
          _
        $region16: #{tpu_custom_call.1} parent=11 // pred_fallthru
          _
        // Predicated region
        $region17: #{tpu_custom_call.1} parent=11 // pred_check
          %p140 = pneg %p96
        $region18: #{tpu_custom_call.1} parent=11 // pred_check_branch
          %142 = sbr.rel (%p140) target = $region20
        $region19: #{tpu_custom_call.1} parent=11 // pred_region
          _
        $region20: #{tpu_custom_call.1} parent=11 // pred_fallthru
          _
      $region12: #{tpu_custom_call.1} parent=5 // pred_fallthru
        _
      %p143 = scmp.lt.s32.totalorder %s12, 4
      // Predicated region
      $region21: #{tpu_custom_call.1} parent=5 // pred_check
        %p144 = pneg %p143
      $region22: #{tpu_custom_call.1} parent=5 // pred_check_branch
        %146 = sbr.rel (%p144) target = $region24
      $region23: #{tpu_custom_call.1} parent=5 // pred_region
        // Predicated region
        $region25: #{tpu_custom_call.1} parent=23 // pred_check
          %p147 = pneg %p48
        $region26: #{tpu_custom_call.1} parent=23 // pred_check_branch
          %149 = sbr.rel (%p147) target = $region28
        $region27: #{tpu_custom_call.1} parent=23 // pred_region
          %s150 = smul.u32 %s19, 2
          %s151 = sadd.s32 %s150, %s20
          %s152 = smul.u32 16, %s151
          %p153 = scmp.lt.s32.totalorder %s152, 63
          %s154 = scalar_select %p153, %s152, 63
          %s155 = smul.addr %s154, 4
          %s156 = scalar_lea.vmem %s0, %s155
          %s157 = smul.u32 %s19, 2
          %s158 = sadd.s32 %s157, %s20
          %s159 = smul.u32 16, %s158
        $region28: #{tpu_custom_call.1} parent=23 // pred_fallthru
          _
      $region24: #{tpu_custom_call.1} parent=5 // pred_fallthru
        _
      %p160 = scmp.le.s32.totalorder 1, %s12
      %p161 = scmp.lt.s32.totalorder %s12, 5
      %p162 = pnand %p160, %p161
      %p163 = pneg %p162
      // Predicated region
      $region29: #{tpu_custom_call.1} parent=5 // pred_check
        _
      $region30: #{tpu_custom_call.1} parent=5 // pred_check_branch
        %165 = sbr.rel (%p162) target = $region32
      $region31: #{tpu_custom_call.1} parent=5 // pred_region
        %s166 = ssub.s32 %s12, 1
        %s167 = smul.u32 %s21, 2
        %s168 = sadd.s32 %s167, %s22
        %s169 = smul.u32 16, %s168
        %p170 = scmp.lt.s32.totalorder %s169, 63
        %s171 = scalar_select %p170, %s169, 63
        %s172 = smul.addr %s171, 4
        %s173 = scalar_lea.vmem %s0, %s172
        %p174 = pneg %p54
        %p175 = pneg %p51
        %p176 = pneg %p75
        %p177 = pneg %p72
        %p178 = pneg %p96
        %p179 = pneg %p93
        %p180 = pneg %p122
        %p181 = pneg %p119
        %s182 = sand.u32 %s109, 1
        %s183 = scalar_lea.sflag [#allocation3], %s182
        %s184 = sand.u32 %s109, 1
        %s185 = smul.addr %s184, 8
        %s186 = scalar_lea.vmem [#allocation2], %s185
        %s187 = smul.u32 %s21, 2
        %s188 = sadd.s32 %s187, %s22
        %s189 = smul.u32 16, %s188
        %p190 = scmp.lt.s32.totalorder %s189, 63
        %s191 = scalar_select %p190, %s189, 63
        %s192 = smul.addr %s191, 4
        %s193 = scalar_lea.vmem %s0, %s192
        %s194 = smul.u32 %s21, 2
        %s195 = sadd.s32 %s194, %s22
        %s196 = smul.u32 16, %s195
        %p198 = scmp.eq.s32.totalorder %s22, 0
        // Predicated region
        $region33: #{tpu_custom_call.1} parent=31 // pred_check
          %p199 = pneg %p198
        $region34: #{tpu_custom_call.1} parent=31 // pred_check_branch
          %201 = sbr.rel (%p199) target = $region36
        $region35: #{tpu_custom_call.1} parent=31 // pred_region
          %202 = vst [vmem:[%s186] sm:$0xff] 0.0
        $region36: #{tpu_custom_call.1} parent=31 // pred_fallthru
          _
        %v203 = vld [vmem:[%s193] sm:$0xf]
        %v204 = vld [vmem:[%s193 + $0x4] sm:$0xf]
        %v205 = vld [vmem:[%s193 + $0x8] sm:$0xf]
        %v206 = vld [vmem:[%s193 + $0xc] sm:$0xf]
        %v207 = vld [vmem:[%s193 + $0x10] sm:$0xf]
        %v208 = vld [vmem:[%s193 + $0x14] sm:$0xf]
        %v209 = vld [vmem:[%s193 + $0x18] sm:$0xf]
        %v210 = vld [vmem:[%s193 + $0x1c] sm:$0xf]
        %v211 = vld [vmem:[%s193 + $0x20] sm:$0xf]
        %v212 = vld [vmem:[%s193 + $0x24] sm:$0xf]
        %v213 = vld [vmem:[%s193 + $0x28] sm:$0xf]
        %v214 = vld [vmem:[%s193 + $0x2c] sm:$0xf]
        %v215 = vld [vmem:[%s193 + $0x30] sm:$0xf]
        %v216 = vld [vmem:[%s193 + $0x34] sm:$0xf]
        %v217 = vld [vmem:[%s193 + $0x38] sm:$0xf]
        %v218 = vld [vmem:[%s193 + $0x3c] sm:$0xf]
        %v219 = vld [vmem:[%s1] sm:$0xf]
        %v220 = vld [vmem:[%s1 + $0x4] sm:$0xf]
        %v221 = vld [vmem:[%s1 + $0x8] sm:$0xf]
        %v222 = vld [vmem:[%s1 + $0xc] sm:$0xf]
        %v223 = vld [vmem:[%s1 + $0x10] sm:$0x3]
        %v224 = vld [vmem:[%s2] sm:$0x1]
        %v226 = vlaneseq
        %v227 = vshrl.u32 %v226, 7
        %v228 = vsub.s32 0, %v227
        %v229 = vrot.slane %v224, %v228
        %v247 = vunpack.c.l.b16 %v203
        %v248 = vunpack.c.l.b16 %v204
        %v249 = vunpack.c.l.b16 %v205
        %v250 = vunpack.c.l.b16 %v206
        %v251 = vunpack.c.l.b16 %v207
        %v252 = vunpack.c.l.b16 %v208
        %v253 = vunpack.c.l.b16 %v209
        %v254 = vunpack.c.l.b16 %v210
        %v255 = vunpack.c.l.b16 %v211
        %v256 = vunpack.c.l.b16 %v212
        %v257 = vunpack.c.l.b16 %v213
        %v258 = vunpack.c.l.b16 %v214
        %v259 = vunpack.c.l.b16 %v215
        %v260 = vunpack.c.l.b16 %v216
        %v261 = vunpack.c.l.b16 %v217
        %v262 = vunpack.c.l.b16 %v218
        %v263 = vpack.c.b16 %v248, %v247
        %v264 = vpack.c.b16 %v250, %v249
        %v265 = vpack.c.b16 %v252, %v251
        %v266 = vpack.c.b16 %v254, %v253
        %v267 = vpack.c.b16 %v256, %v255
        %v268 = vpack.c.b16 %v258, %v257
        %v269 = vpack.c.b16 %v260, %v259
        %v270 = vpack.c.b16 %v262, %v261
        %v276 = vunpack.c.l.b16 %v219
        %v277 = vunpack.c.l.b16 %v220
        %v278 = vunpack.c.l.b16 %v221
        %v279 = vunpack.c.l.b16 %v222
        %v280 = vunpack.c.l.b16 %v223
        %v281 = vpack.c.b16 %v277, %v276
        %v282 = vpack.c.b16 %v279, %v278
        %v283 = vpack.c.b16 %v280, %v280
        %vm286 = vcmask 293888
        %v288 = vsel %vm286, %v263, 0
        %v291 = vsel %vm286, %v264, 0
        %v294 = vsel %vm286, %v265, 0
        %v297 = vsel %vm286, %v266, 0
        %v300 = vsel %vm286, %v267, 0
        %v303 = vsel %vm286, %v268, 0
        %v306 = vsel %vm286, %v269, 0
        %v309 = vsel %vm286, %v270, 0
        %vm311 = vcmask 1041408
        %v313 = vsel %vm311, %v283, 0
        %315 = vmatprep.subr.bf16.mxu0 0
        %316 = vmatpush1.bf16.msra.mxu0 %v281
        %317 = vmatprep.subr.bf16.mxu0 0
        %318 = vmatpush1.bf16.msra.mxu0 %v282
        %319 = vmatprep.subr.bf16.mxu0 0
        %320 = vmatpush1.bf16.msra.mxu0 %v313
        %321 = vmatprep.subr.bf16.mxu0 0
        %322 = vmatpush1.bf16.msra.mxu0 0
        %323 = vmatprep.subr.bf16.mxu0 0
        %324 = vmatpush1.bf16.msra.mxu0 0
        %325 = vmatprep.subr.bf16.mxu0 0
        %326 = vmatpush1.bf16.msra.mxu0 0
        %327 = vmatprep.subr.bf16.mxu0 0
        %328 = vmatpush1.bf16.msra.mxu0 0
        %329 = vmatprep.subr.bf16.mxu0 0
        %330 = vmatpush1.bf16.msra.mxu0 0
        %331 = vmatprep.subr.bf16.mxu0 0
        %332 = vmatpush1.bf16.msra.mxu0 0
        %333 = vmatprep.subr.bf16.mxu0 0
        %334 = vmatpush1.bf16.msra.mxu0 0
        %335 = vmatprep.subr.bf16.mxu0 0
        %336 = vmatpush1.bf16.msra.mxu0 0
        %337 = vmatprep.subr.bf16.mxu0 0
        %338 = vmatpush1.bf16.msra.mxu0 0
        %339 = vmatprep.subr.bf16.mxu0 0
        %340 = vmatpush1.bf16.msra.mxu0 0
        %341 = vmatprep.subr.bf16.mxu0 0
        %342 = vmatpush1.bf16.msra.mxu0 0
        %343 = vmatprep.subr.bf16.mxu0 0
        %344 = vmatpush1.bf16.msra.mxu0 0
        %345 = vmatprep.subr.bf16.mxu0 0
        %346 = vmatpush1.bf16.msra.mxu0 0
        %347 = vmatprep.mubr.bf16.mxu0 0
        %348 = vmatmul.mubr.bf16.gmra.mrb[0].mxu0 %v288
        %v349 = vpop.f32.mrb[0].mxu0
        %v350 = vadd.f32 %v229, %v349
        %v351 = vpop.f32.mrb[0].mxu0
        %v352 = vpop.f32.mrb[0].mxu0
        %v353 = vadd.f32 %v229, %v352
        %v354 = vpop.f32.mrb[0].mxu0
        %355 = vmatprep.mubr.bf16.mxu0 0
        %356 = vmatmul.mubr.bf16.gmra.mrb[0].mxu0 %v291
        %v357 = vpop.f32.mrb[0].mxu0
        %v358 = vadd.f32 %v229, %v357
        %v359 = vpop.f32.mrb[0].mxu0
        %v360 = vpop.f32.mrb[0].mxu0
        %v361 = vadd.f32 %v229, %v360
        %v362 = vpop.f32.mrb[0].mxu0
        %363 = vmatprep.mubr.bf16.mxu0 0
        %364 = vmatmul.mubr.bf16.gmra.mrb[0].mxu0 %v294
        %v365 = vpop.f32.mrb[0].mxu0
        %v366 = vadd.f32 %v229, %v365
        %v367 = vpop.f32.mrb[0].mxu0
        %v368 = vpop.f32.mrb[0].mxu0
        %v369 = vadd.f32 %v229, %v368
        %v370 = vpop.f32.mrb[0].mxu0
        %371 = vmatprep.mubr.bf16.mxu0 0
        %372 = vmatmul.mubr.bf16.gmra.mrb[0].mxu0 %v297
        %v373 = vpop.f32.mrb[0].mxu0
        %v374 = vadd.f32 %v229, %v373
        %v375 = vpop.f32.mrb[0].mxu0
        %v376 = vpop.f32.mrb[0].mxu0
        %v377 = vadd.f32 %v229, %v376
        %v378 = vpop.f32.mrb[0].mxu0
        %379 = vmatprep.mubr.bf16.mxu0 0
        %380 = vmatmul.mubr.bf16.gmra.mrb[0].mxu0 %v300
        %v381 = vpop.f32.mrb[0].mxu0
        %v382 = vadd.f32 %v229, %v381
        %v383 = vpop.f32.mrb[0].mxu0
        %v384 = vpop.f32.mrb[0].mxu0
        %v385 = vadd.f32 %v229, %v384
        %v386 = vpop.f32.mrb[0].mxu0
        %387 = vmatprep.mubr.bf16.mxu0 0
        %388 = vmatmul.mubr.bf16.gmra.mrb[0].mxu0 %v303
        %v389 = vpop.f32.mrb[0].mxu0
        %v390 = vadd.f32 %v229, %v389
        %v391 = vpop.f32.mrb[0].mxu0
        %v392 = vpop.f32.mrb[0].mxu0
        %v393 = vadd.f32 %v229, %v392
        %v394 = vpop.f32.mrb[0].mxu0
        %395 = vmatprep.mubr.bf16.mxu0 0
        %396 = vmatmul.mubr.bf16.gmra.mrb[0].mxu0 %v306
        %v397 = vpop.f32.mrb[0].mxu0
        %v398 = vadd.f32 %v229, %v397
        %v399 = vpop.f32.mrb[0].mxu0
        %v400 = vpop.f32.mrb[0].mxu0
        %v401 = vadd.f32 %v229, %v400
        %v402 = vpop.f32.mrb[0].mxu0
        %403 = vmatprep.mubr.bf16.mxu0 0
        %404 = vmatmul.mubr.bf16.gmra.mrb[0].mxu0 %v309
        %v405 = vpop.f32.mrb[0].mxu0
        %v406 = vadd.f32 %v229, %v405
        %v407 = vpop.f32.mrb[0].mxu0
        %v408 = vpop.f32.mrb[0].mxu0
        %v409 = vadd.f32 %v229, %v408
        %v410 = vpop.f32.mrb[0].mxu0
        %411 = vdwg.mxu0
        %v412 = vmax.f32 %v350, 0.0
        %v413 = vmax.f32 %v353, 0.0
        %v414 = vmax.f32 %v358, 0.0
        %v415 = vmax.f32 %v361, 0.0
        %v416 = vmax.f32 %v366, 0.0
        %v417 = vmax.f32 %v369, 0.0
        %v418 = vmax.f32 %v374, 0.0
        %v419 = vmax.f32 %v377, 0.0
        %v420 = vmax.f32 %v382, 0.0
        %v421 = vmax.f32 %v385, 0.0
        %v422 = vmax.f32 %v390, 0.0
        %v423 = vmax.f32 %v393, 0.0
        %v424 = vmax.f32 %v398, 0.0
        %v425 = vmax.f32 %v401, 0.0
        %v426 = vmax.f32 %v406, 0.0
        %v427 = vmax.f32 %v409, 0.0
        %v428 = vld [vmem:[%s186] sm:$0xff]
        %v429 = vadd.f32 %v412, %v413
        %v430 = vadd.f32 %v429, %v414
        %v431 = vadd.f32 %v430, %v415
        %v432 = vadd.f32 %v431, %v416
        %v433 = vadd.f32 %v432, %v417
        %v434 = vadd.f32 %v433, %v418
        %v435 = vadd.f32 %v434, %v419
        %v436 = vadd.f32 %v435, %v420
        %v437 = vadd.f32 %v436, %v421
        %v438 = vadd.f32 %v437, %v422
        %v439 = vadd.f32 %v438, %v423
        %v440 = vadd.f32 %v439, %v424
        %v441 = vadd.f32 %v440, %v425
        %v442 = vadd.f32 %v441, %v426
        %v443 = vadd.f32 %v442, %v427
        %v444 = vadd.f32 %v428, %v443
        %445 = vst [vmem:[%s186] sm:$0xff] %v444
        %s446 = sand.u32 %s109, 1
        %s447 = scalar_lea.sflag [#allocation3], %s446
        %s448 = sand.u32 %s109, 1
        %s449 = smul.addr %s448, 8
        %s450 = scalar_lea.vmem [#allocation2], %s449
        // Predicated region
        $region37: #{tpu_custom_call.1} parent=31 // pred_check
          %p451 = pneg %p119
        $region38: #{tpu_custom_call.1} parent=31 // pred_check_branch
          %453 = sbr.rel (%p451) target = $region40
        $region39: #{tpu_custom_call.1} parent=31 // pred_region
          %s455 = ssub.s32 128, 128
          %456 = vsyncadd %s447, %s455
          %s457 = smul.addr %s21, 128
          %s458 = scalar_lea.hbm %s3, %s457
          %s460 = sshll.u32 %s450, 4
          %s461 = int_to_ptr.vmem [resolvable:$true] %s460
          %463 = dma.vmem_to_hbm [thread:$0]  %s461, 128, %s458, %s447
        $region40: #{tpu_custom_call.1} parent=31 // pred_fallthru
          _
      $region32: #{tpu_custom_call.1} parent=5 // pred_fallthru
        _
      %p464 = scmp.le.s32.totalorder 2, %s12
      // Predicated region
      $region41: #{tpu_custom_call.1} parent=5 // pred_check
        %p465 = pneg %p464
      $region42: #{tpu_custom_call.1} parent=5 // pred_check_branch
        %467 = sbr.rel (%p465) target = $region44
      $region43: #{tpu_custom_call.1} parent=5 // pred_region
        %s468 = ssub.s32 %s12, 2
        // Predicated region
        $region45: #{tpu_custom_call.1} parent=43 // pred_check
          %p469 = pneg %p125
        $region46: #{tpu_custom_call.1} parent=43 // pred_check_branch
          %471 = sbr.rel (%p469) target = $region48
        $region47: #{tpu_custom_call.1} parent=43 // pred_region
          %s472 = sand.u32 %s110, 1
          %s473 = scalar_lea.sflag [#allocation3], %s472
          %s474 = sand.u32 %s110, 1
          %s475 = smul.addr %s474, 8
          %s476 = scalar_lea.vmem [#allocation2], %s475
          %477 = dma.done %s473, 128
        $region48: #{tpu_custom_call.1} parent=43 // pred_fallthru
          _
      $region44: #{tpu_custom_call.1} parent=5 // pred_fallthru
        _
    $region6: #{tpu_custom_call.1} parent=1 // loop_footer
      %s16 = sadd.s32 1, %s12
    $region7: #{tpu_custom_call.1} parent=1 // loop_footer_branch
      %11 = sbr.rel target = $region3
    $region8: #{tpu_custom_call.1} parent=1 // loop_exit
      _
    %478 = vsyncpa [#allocation3], 1
    %s479 = scalar_lea.sflag [#allocation3], 1
    %480 = vsyncpa %s479, 1

</llo_original>
